<compile_context>
chip_gen: v6e
topology: v6e:2x2x1
jax: 0.10.0
libtpu: 0.0.40
codegen_flags: <defaults>
</compile_context>

<pallas_src>
import functools

import jax
import jax.numpy as jnp
from jax.experimental import pallas as pl
from jax.experimental.pallas import tpu as pltpu


def _round_up(x: int, m: int) -> int:
    return (x + m - 1) // m * m


def _tile_config():
    """Per-generation default tiles (tm, tn, tk, vmem_limit_bytes)."""
    kind = ""
    try:
        kind = jax.devices()[0].device_kind.lower()
    except Exception:  # pragma: no cover - e.g. no devices during tracing
        pass
    if "v7" in kind or "7x" in kind:
        # v7x: 64 MiB VMEM/TC, 3.2 TB/s HBM -> ~341 fl/B intensity is enough;
        # keep the footprint small so both pipeline stages fit comfortably.
        return 512, 1024, 1024, None
    if "v6" in kind:
        # v6e needs ~680 fl/B; 1024x2048 tiles reach it.  Footprint ~28 MiB is
        # above the 32 MiB scoped default, so raise the limit.
        return 1024, 2048, 1024, 64 * 1024 * 1024
    if "v5" in kind:
        # v5e: 512x512 gives ~256 fl/B vs ~240 needed; ~6 MiB fits the 16 MiB default.
        return 512, 512, 1024, None
    # Unknown generation: moderate tiles that fit every default scoped-VMEM limit.
    return 512, 512, 1024, None


def mlp_kernel(x_ref, w_ref, b_ref, o_ref):
    # x_ref: (tm, tk) bf16   w_ref: (tk, tn) bf16
    # b_ref: (1, tn)  f32    o_ref: (tm, tn) f32 -- doubles as the accumulator
    # (its (i, j) block index is constant across the K grid axis, so it stays
    # resident in VMEM for the whole reduction).
    k = pl.program_id(2)

    @pl.when(k == 0)
    def _():
        o_ref[...] = jnp.zeros_like(o_ref)

    o_ref[...] += jnp.dot(
        x_ref[...], w_ref[...], preferred_element_type=jnp.float32
    )

    @pl.when(k == pl.num_programs(2) - 1)
    def _():
        # f32 epilogue: bias add + tanh, in place.
        o_ref[...] = jnp.tanh(o_ref[...] + b_ref[...])


@functools.partial(
    jax.jit,
    static_argnames=("out_features", "tm", "tn", "tk", "vmem_limit"),
)
def _mlp_forward(features, w_padded, b_padded, *, out_features, tm, tn, tk,
                 vmem_limit):
    """Hot path: features [B, In] f32 -> tanh(features @ W + b) [B, Out] f32.

    w_padded: [Kp, Np] bf16 (pre-cast, pre-padded), b_padded: [1, Np] f32.
    """
    B, In = features.shape
    Kp, Np = w_padded.shape

    # Shrink the batch tile for small problems while keeping sublane alignment.
    tm = min(tm, _round_up(B, 8))
    Mp = _round_up(B, tm)

    # Only the activations are cast/padded per call; weight/bias were prepared
    # once outside the hot path.
    x = features.astype(jnp.bfloat16)
    if (Mp, Kp) != (B, In):
        x = jnp.pad(x, ((0, Mp - B), (0, Kp - In)))

    grid = (Mp // tm, Np // tn, Kp // tk)

    out = pl.pallas_call(
        mlp_kernel,
        out_shape=jax.ShapeDtypeStruct((Mp, Np), jnp.float32),
        grid=grid,
        in_specs=[
            pl.BlockSpec((tm, tk), lambda i, j, k: (i, k)),
            pl.BlockSpec((tk, tn), lambda i, j, k: (k, j)),
            pl.BlockSpec((1, tn), lambda i, j, k: (0, j)),
        ],
        out_specs=pl.BlockSpec((tm, tn), lambda i, j, k: (i, j)),
        compiler_params=pltpu.CompilerParams(
            dimension_semantics=("parallel", "parallel", "arbitrary"),
            vmem_limit_bytes=vmem_limit,
        ),
        cost_estimate=pl.CostEstimate(
            flops=2 * Mp * Kp * Np,
            transcendentals=Mp * Np,
            # Account for re-streaming: x is streamed Np/tn times, W Mp/tm times.
            bytes_accessed=(Mp * Kp * 2) * (Np // tn)
            + (Kp * Np * 2) * (Mp // tm)
            + Mp * Np * 4
            + Np * 4,
        ),
    )(x, w_padded, b_padded)

    if (Mp, Np) != (B, out_features):
        out = out[:B, :out_features]
    return out


def make_mlp_layer(weight, bias, *, tm=None, tn=None, tk=None):
    """Build the MLPLayer forward fn; prepares (casts/pads) params exactly once.

    weight: [In, Out] f32 (PyTorch Linear weight transposed), bias: [Out] f32.
    Returns: callable features [B, In] f32 -> [B, Out] f32.
    """
    In, Out = weight.shape
    d_tm, d_tn, d_tk, vmem_limit = _tile_config()
    tm = d_tm if tm is None else tm
    tn = d_tn if tn is None else tn
    tk = d_tk if tk is None else tk

    # Shrink N/K tiles for small layers while keeping (8, 128) alignment.
    tn = min(tn, _round_up(Out, 128))
    tk = min(tk, _round_up(In, 128))
    Kp = _round_up(In, tk)
    Np = _round_up(Out, tn)

    # One-time parameter prep (outside the per-call hot path): bf16 MXU weight,
    # zero-padded up to tile multiples (zeros contribute nothing to the matmul;
    # keep the K padding -- partial blocks would read OOB in the reduction).
    w = jnp.asarray(weight, jnp.bfloat16)
    if (Kp, Np) != (In, Out):
        w = jnp.pad(w, ((0, Kp - In), (0, Np - Out)))
    b2 = jnp.asarray(bias, jnp.float32).reshape(1, Out)
    if Np != Out:
        b2 = jnp.pad(b2, ((0, 0), (0, Np - Out)))

    def forward(features):
        assert features.shape[-1] == In, (features.shape, In)
        return _mlp_forward(
            features, w, b2,
            out_features=Out, tm=tm, tn=tn, tk=tk, vmem_limit=vmem_limit,
        )

    return forward


def mlp_layer(features, weight, bias, **tile_kwargs):
    """One-shot convenience wrapper (prepares params, then runs the forward)."""
    return make_mlp_layer(weight, bias, **tile_kwargs)(features)


if __name__ == "__main__":
    # Small shapes consistent with the module: a dense layer on [batch, hidden].
    batch, input_size, output_size = 8, 32, 32

    key = jax.random.PRNGKey(0)
    k_x, k_w, k_b = jax.random.split(key, 3)

    # Deterministic parameter init mimicking nn.Linear (uniform +/- 1/sqrt(in)).
    bound = 1.0 / (input_size ** 0.5)
    weight = jax.random.uniform(
        k_w, (input_size, output_size), jnp.float32, minval=-bound, maxval=bound
    )
    bias = jax.random.uniform(
        k_b, (output_size,), jnp.float32, minval=-bound, maxval=bound
    )
    features = jax.random.normal(k_x, (batch, input_size), jnp.float32)

    layer = make_mlp_layer(weight, bias)   # params prepared once
    out = layer(features)
    out = jax.block_until_ready(out)

    # Reference with the same precision path (bf16 inputs, f32 accumulation).
    ref = jnp.tanh(
        jnp.dot(
            features.astype(jnp.bfloat16),
            weight.astype(jnp.bfloat16),
            preferred_element_type=jnp.float32,
        )
        + bias
    )
    # Loose sanity check against full-f32 math as well.
    ref_f32 = jnp.tanh(features @ weight + bias)

    assert out.shape == (batch, output_size)
    assert out.dtype == jnp.float32
    assert jnp.allclose(out, ref, atol=1e-4, rtol=1e-4)
    assert jnp.allclose(out, ref_f32, atol=5e-2, rtol=5e-2)

    print("KERNEL_OK")
</pallas_src>

<mosaic_0001>
module attributes {stable_mosaic.version = 11 : i64} {
  func.func @mlp_kernel(%arg0: i32, %arg1: i32, %arg2: i32, %arg3: memref<8x128xbf16, #tpu.memory_space<vmem>>, %arg4: memref<128x128xbf16, #tpu.memory_space<vmem>>, %arg5: memref<1x128xf32, #tpu.memory_space<vmem>>, %arg6: memref<8x128xf32, #tpu.memory_space<vmem>>) attributes {dimension_semantics = [#tpu.dimension_semantics<parallel>, #tpu.dimension_semantics<parallel>, #tpu.dimension_semantics<arbitrary>], iteration_bounds = array<i64: 1, 1, 1>, scalar_prefetch = 0 : i64, scratch_operands = 0 : i64, tpu.core_type = #tpu.core_type<tc>, window_params = [{transform_indices = @transform_0, window_bounds = array<i64: 8, 128>}, {transform_indices = @transform_1, window_bounds = array<i64: 128, 128>}, {transform_indices = @transform_2, window_bounds = array<i64: 1, 128>}, {transform_indices = @transform_3, window_bounds = array<i64: 8, 128>}]} {
    %c0_i32 = arith.constant 0 : i32
    %0 = arith.cmpi eq, %arg2, %c0_i32 : i32
    %1 = arith.extui %0 : i1 to i32
    %c0_i32_0 = arith.constant 0 : i32
    %2 = arith.cmpi ne, %1, %c0_i32_0 : i32
    scf.if %2 {
      %cst_10 = arith.constant 0.000000e+00 : f32
      %12 = vector.broadcast %cst_10 : f32 to vector<8x128xf32>
      %c0_11 = arith.constant 0 : index
      %c0_12 = arith.constant 0 : index
      %13 = vector.load %arg6[%c0_11, %c0_12] : memref<8x128xf32, #tpu.memory_space<vmem>>, vector<8x128xf32>
      tpu.vector_store %arg6[%c0_11, %c0_12], %12 {strides = array<i32>} : memref<8x128xf32, #tpu.memory_space<vmem>>, vector<8x128xf32>,
    } else {
    }
    %c0 = arith.constant 0 : index
    %c0_1 = arith.constant 0 : index
    %3 = vector.load %arg6[%c0, %c0_1] : memref<8x128xf32, #tpu.memory_space<vmem>>, vector<8x128xf32>
    %c0_2 = arith.constant 0 : index
    %c0_3 = arith.constant 0 : index
    %4 = vector.load %arg3[%c0_2, %c0_3] : memref<8x128xbf16, #tpu.memory_space<vmem>>, vector<8x128xbf16>
    %c0_4 = arith.constant 0 : index
    %c0_5 = arith.constant 0 : index
    %5 = vector.load %arg4[%c0_4, %c0_5] : memref<128x128xbf16, #tpu.memory_space<vmem>>, vector<128x128xbf16>
    %cst = arith.constant dense<0.000000e+00> : vector<8x128xf32>
    %6 = tpu.matmul %4, %5, %cst {dimension_numbers = #tpu.dot_dimension_numbers<[1], [0], [0], [1], [0, 0, 1, 1], [], []>} : vector<8x128xbf16>, vector<128x128xbf16>, vector<8x128xf32> -> vector<8x128xf32>
    %7 = arith.addf %3, %6 : vector<8x128xf32>
    %c0_6 = arith.constant 0 : index
    %c0_7 = arith.constant 0 : index
    %8 = vector.load %arg6[%c0_6, %c0_7] : memref<8x128xf32, #tpu.memory_space<vmem>>, vector<8x128xf32>
    tpu.vector_store %arg6[%c0_6, %c0_7], %7 {strides = array<i32>} : memref<8x128xf32, #tpu.memory_space<vmem>>, vector<8x128xf32>,
    %c0_i32_8 = arith.constant 0 : i32
    %9 = arith.cmpi eq, %arg2, %c0_i32_8 : i32
    %10 = arith.extui %9 : i1 to i32
    %c0_i32_9 = arith.constant 0 : i32
    %11 = arith.cmpi ne, %10, %c0_i32_9 : i32
    scf.if %11 {
      %c0_10 = arith.constant 0 : index
      %c0_11 = arith.constant 0 : index
      %12 = vector.load %arg6[%c0_10, %c0_11] : memref<8x128xf32, #tpu.memory_space<vmem>>, vector<8x128xf32>
      %c0_12 = arith.constant 0 : index
      %c0_13 = arith.constant 0 : index
      %13 = vector.load %arg5[%c0_12, %c0_13] : memref<1x128xf32, #tpu.memory_space<vmem>>, vector<1x128xf32>
      %14 = vector.broadcast %13 : vector<1x128xf32> to vector<8x128xf32>
      %15 = arith.addf %12, %14 : vector<8x128xf32>
      %16 = math.tanh %15 : vector<8x128xf32>
      %c0_14 = arith.constant 0 : index
      %c0_15 = arith.constant 0 : index
      %17 = vector.load %arg6[%c0_14, %c0_15] : memref<8x128xf32, #tpu.memory_space<vmem>>, vector<8x128xf32>
      tpu.vector_store %arg6[%c0_14, %c0_15], %16 {strides = array<i32>} : memref<8x128xf32, #tpu.memory_space<vmem>>, vector<8x128xf32>,
    } else {
    }
    return
  }
  func.func @transform_0(%arg0: i32, %arg1: i32, %arg2: i32) -> (i32, i32) {
    %c0_i32 = arith.constant 0 : i32
    return %arg0, %arg2 : i32, i32
  }
  func.func @transform_1(%arg0: i32, %arg1: i32, %arg2: i32) -> (i32, i32) {
    %c0_i32 = arith.constant 0 : i32
    return %arg2, %arg1 : i32, i32
  }
  func.func @transform_2(%arg0: i32, %arg1: i32, %arg2: i32) -> (i32, i32) {
    %c0_i32 = arith.constant 0 : i32
    %c0_i32_0 = arith.constant 0 : i32
    return %c0_i32, %arg1 : i32, i32
  }
  func.func @transform_3(%arg0: i32, %arg1: i32, %arg2: i32) -> (i32, i32) {
    %c0_i32 = arith.constant 0 : i32
    return %arg0, %arg1 : i32, i32
  }
}

</mosaic_0001>

<llo_original>
// kernel: _mlp_forward.1
$region0: #{_mlp_forward.1}
  #allocation0 [shape = 'u32[]', space=smem, size = 0x4, offset = 0x4, fixed_abs, tag = 'smem constant byte address 0x4 - core index']
  #allocation1 [shape = 'u32[144,128]{1,0:T(1,128)}', space=vmem, size = 0x12000, scoped, tag = 'internal scratch']
  %s0 = inlined_call_operand.vmem [shape: bf16[8,128], index: 0, kind: input, shape index: {}]
  %s1 = inlined_call_operand.hbm [shape: bf16[128,128], index: 1, kind: input, shape index: {}]
  %s2 = inlined_call_operand.vmem [shape: f32[1,128], index: 2, kind: input, shape index: {}]
  %s3 = inlined_call_operand.hbm [shape: f32[8,128], index: 3, kind: output, shape index: {}]
  %s4 = sld [smem:[#allocation0]]
  $region34: #{_mlp_forward.1} parent=0
    _
  %s6 = ssub.s32 1, %s4
  %s7 = scalar_select 0, %s6, %s4
  $region1: #{_mlp_forward.1} parent=0
    #allocation2 [shape = 'u8[32768]{0}', space=vmem, size = 0x8000, scoped, tag = 'input window, operand 1, single buffered']
    #allocation3 [shape = 's32[1]{0}', space=sflag, size = 0x4, scoped, tag = 'scoped memory for _mlp_forward.1']
    #allocation4 [shape = 's32[1]{0}', space=sflag, size = 0x4, scoped, tag = 'scoped memory for _mlp_forward.1']
    #allocation5 [shape = 'u8[4096]{0}', space=vmem, size = 0x1000, scoped, tag = 'output window, operand 0, single buffered']
    %8 = vsyncpa [#allocation3], 0
    %9 = vsyncpa [#allocation4], 0
    // Predicated region
    $region2: #{_mlp_forward.1} parent=1 // pred_check
      _
    $region3: #{_mlp_forward.1} parent=1 // pred_check_branch
      %11 = sbr.rel (0) target = $region5
    $region4: #{_mlp_forward.1} parent=1 // pred_region
      _
    $region5: #{_mlp_forward.1} parent=1 // pred_fallthru
      _
    // Predicated region
    $region6: #{_mlp_forward.1} parent=1 // pred_check
      _
    $region7: #{_mlp_forward.1} parent=1 // pred_check_branch
      %13 = sbr.rel (0) target = $region9
    $region8: #{_mlp_forward.1} parent=1 // pred_region
      %s15 = ssub.s32 1024, 1024
      %16 = vsyncadd [#allocation3], %s15
      %s17 = sshll.u32 [#allocation2], 4
      %s18 = int_to_ptr.vmem [resolvable:$true] %s17
      %23 = dma.hbm_to_vmem [thread:$0]  %s1, 1024, %s18, [#allocation3], 64, 64, 4
    $region9: #{_mlp_forward.1} parent=1 // pred_fallthru
      _
    // Predicated region
    $region10: #{_mlp_forward.1} parent=1 // pred_check
      _
    $region11: #{_mlp_forward.1} parent=1 // pred_check_branch
      %25 = sbr.rel (0) target = $region13
    $region12: #{_mlp_forward.1} parent=1 // pred_region
      _
    $region13: #{_mlp_forward.1} parent=1 // pred_fallthru
      _
    // Predicated region
    $region14: #{_mlp_forward.1} parent=1 // pred_check
      _
    $region15: #{_mlp_forward.1} parent=1 // pred_check_branch
      %27 = sbr.rel (0) target = $region17
    $region16: #{_mlp_forward.1} parent=1 // pred_region
      %28 = dma.done [#allocation3], 1024
    $region17: #{_mlp_forward.1} parent=1 // pred_fallthru
      _
    %p30 = scmp.eq.s32.totalorder 0, 0
    // Predicated region
    $region18: #{_mlp_forward.1} parent=1 // pred_check
      %p31 = pneg %p30
    $region19: #{_mlp_forward.1} parent=1 // pred_check_branch
      %33 = sbr.rel (%p31) target = $region21
    $region20: #{_mlp_forward.1} parent=1 // pred_region
      %34 = vst [vmem:[#allocation5] sm:$0xff] 0.0
    $region21: #{_mlp_forward.1} parent=1 // pred_fallthru
      _
    %v35 = vld [vmem:[#allocation5] sm:$0xff]
    %v36 = vld [vmem:[%s0] sm:$0xf]
    %v37 = vld [vmem:[#allocation2] sm:$0xf]
    %v38 = vld [vmem:[#allocation2 + $0x4] sm:$0xf]
    %v39 = vld [vmem:[#allocation2 + $0x8] sm:$0xf]
    %v40 = vld [vmem:[#allocation2 + $0xc] sm:$0xf]
    %v41 = vld [vmem:[#allocation2 + $0x10] sm:$0xf]
    %v42 = vld [vmem:[#allocation2 + $0x14] sm:$0xf]
    %v43 = vld [vmem:[#allocation2 + $0x18] sm:$0xf]
    %v44 = vld [vmem:[#allocation2 + $0x1c] sm:$0xf]
    %v45 = vld [vmem:[#allocation2 + $0x20] sm:$0xf]
    %v46 = vld [vmem:[#allocation2 + $0x24] sm:$0xf]
    %v47 = vld [vmem:[#allocation2 + $0x28] sm:$0xf]
    %v48 = vld [vmem:[#allocation2 + $0x2c] sm:$0xf]
    %v49 = vld [vmem:[#allocation2 + $0x30] sm:$0xf]
    %v50 = vld [vmem:[#allocation2 + $0x34] sm:$0xf]
    %v51 = vld [vmem:[#allocation2 + $0x38] sm:$0xf]
    %v52 = vld [vmem:[#allocation2 + $0x3c] sm:$0xf]
    %v69 = vunpack.c.l.b16 %v37
    %v70 = vunpack.c.l.b16 %v38
    %v71 = vunpack.c.l.b16 %v39
    %v72 = vunpack.c.l.b16 %v40
    %v73 = vunpack.c.l.b16 %v41
    %v74 = vunpack.c.l.b16 %v42
    %v75 = vunpack.c.l.b16 %v43
    %v76 = vunpack.c.l.b16 %v44
    %v77 = vunpack.c.l.b16 %v45
    %v78 = vunpack.c.l.b16 %v46
    %v79 = vunpack.c.l.b16 %v47
    %v80 = vunpack.c.l.b16 %v48
    %v81 = vunpack.c.l.b16 %v49
    %v82 = vunpack.c.l.b16 %v50
    %v83 = vunpack.c.l.b16 %v51
    %v84 = vunpack.c.l.b16 %v52
    %v85 = vpack.c.b16 %v70, %v69
    %v86 = vpack.c.b16 %v72, %v71
    %v87 = vpack.c.b16 %v74, %v73
    %v88 = vpack.c.b16 %v76, %v75
    %v89 = vpack.c.b16 %v78, %v77
    %v90 = vpack.c.b16 %v80, %v79
    %v91 = vpack.c.b16 %v82, %v81
    %v92 = vpack.c.b16 %v84, %v83
    %101 = vmatprep.subr.bf16.mxu0 0
    %102 = vmatpush1.bf16.msra.mxu0 %v92
    %103 = vmatprep.subr.bf16.mxu0 0
    %104 = vmatpush1.bf16.msra.mxu0 %v91
    %105 = vmatprep.subr.bf16.mxu0 0
    %106 = vmatpush1.bf16.msra.mxu0 %v90
    %107 = vmatprep.subr.bf16.mxu0 0
    %108 = vmatpush1.bf16.msra.mxu0 %v89
    %109 = vmatprep.subr.bf16.mxu0 0
    %110 = vmatpush1.bf16.msra.mxu0 %v88
    %111 = vmatprep.subr.bf16.mxu0 0
    %112 = vmatpush1.bf16.msra.mxu0 %v87
    %113 = vmatprep.subr.bf16.mxu0 0
    %114 = vmatpush1.bf16.msra.mxu0 %v86
    %115 = vmatprep.subr.bf16.mxu0 0
    %116 = vmatpush1.bf16.msra.mxu0 %v85
    %117 = vmatprep.subr.bf16.mxu0 0
    %118 = vmatpush2.bf16.msra.mxu0 0
    %119 = vmatprep.subr.bf16.mxu0 0
    %120 = vmatpush2.bf16.msra.mxu0 0
    %121 = vmatprep.subr.bf16.mxu0 0
    %122 = vmatpush2.bf16.msra.mxu0 0
    %123 = vmatprep.subr.bf16.mxu0 0
    %124 = vmatpush2.bf16.msra.mxu0 0
    %125 = vmatprep.subr.bf16.mxu0 0
    %126 = vmatpush2.bf16.msra.mxu0 0
    %127 = vmatprep.subr.bf16.mxu0 0
    %128 = vmatpush2.bf16.msra.mxu0 0
    %129 = vmatprep.subr.bf16.mxu0 0
    %130 = vmatpush2.bf16.msra.mxu0 0
    %131 = vmatprep.subr.bf16.mxu0 0
    %132 = vmatpush2.bf16.msra.mxu0 0
    %133 = vmatprep.mubr.bf16.mxu0 0
    %134 = vmatmul.mubr.bf16.gmra.mxu0 %v36
    %v135 = vpop.f32.mrf.mxu0
    %v136 = vadd.f32 0.0, %v135
    %v137 = vpop.f32.mrf.mxu0
    %v138 = vpop.f32.mrf.mxu0
    %v139 = vpop.f32.mrf.mxu0
    %140 = vdwg.mxu0
    %v141 = vadd.f32 %v35, %v136
    %142 = vst [vmem:[#allocation5] sm:$0xff] %v141
    // Predicated region
    $region22: #{_mlp_forward.1} parent=1 // pred_check
      %p143 = pneg %p30
    $region23: #{_mlp_forward.1} parent=1 // pred_check_branch
      %145 = sbr.rel (%p143) target = $region25
    $region24: #{_mlp_forward.1} parent=1 // pred_region
      %v146 = vld [vmem:[#allocation5] sm:$0xff]
      %v147 = vld [vmem:[%s2] sm:$0x1]
      %v149 = vlaneseq
      %v150 = vshrl.u32 %v149, 7
      %v151 = vsub.s32 0, %v150
      %v152 = vrot.slane %v147, %v151
      %v154 = vadd.f32 %v146, %v152
      %v155 = vtanh.pop %v154
      %156 = vst [vmem:[#allocation5] sm:$0xff] %v155
    $region25: #{_mlp_forward.1} parent=1 // pred_fallthru
      _
    // Predicated region
    $region26: #{_mlp_forward.1} parent=1 // pred_check
      _
    $region27: #{_mlp_forward.1} parent=1 // pred_check_branch
      %158 = sbr.rel (0) target = $region29
    $region28: #{_mlp_forward.1} parent=1 // pred_region
      %s160 = ssub.s32 128, 128
      %161 = vsyncadd [#allocation4], %s160
      %s163 = sshll.u32 [#allocation5], 4
      %s164 = int_to_ptr.vmem [resolvable:$true] %s163
      %166 = dma.vmem_to_hbm [thread:$0]  %s164, 128, %s3, [#allocation4]
    $region29: #{_mlp_forward.1} parent=1 // pred_fallthru
      _
    // Predicated region
    $region30: #{_mlp_forward.1} parent=1 // pred_check
      _
    $region31: #{_mlp_forward.1} parent=1 // pred_check_branch
      %168 = sbr.rel (0) target = $region33
    $region32: #{_mlp_forward.1} parent=1 // pred_region
      %169 = dma.done [#allocation4], 128
    $region33: #{_mlp_forward.1} parent=1 // pred_fallthru
      _
    %170 = vsyncpa [#allocation3], 1
    %171 = vsyncpa [#allocation4], 1

</llo_original>
